<compile_context>
chip_gen: v5e
topology: v5e:2x2
jax: 0.10.0
libtpu: 0.0.40
codegen_flags: <defaults>
</compile_context>

<pallas_src>
import jax
import jax.numpy as jnp
from jax.experimental import pallas as pl
from jax.experimental.pallas import tpu as pltpu

LANE = 128
SUBLANE = 8
MAX_ROWS_PER_TILE = 2048     # 2048 * 128 * 4 B = 1 MiB per plane per block


def _round_up(x, m):
    return (x + m - 1) // m * m


def perspective_camera_kernel(params_ref, x_ref, y_ref, z_ref, u_ref, v_ref):
    # params_ref: (B, 16) f32 in SMEM, per batch:
    #   [r00 r01 r02 r10 r11 r12 r20 r21 r22 tx ty tz fx fy cx cy]
    # x/y/z_ref:  (1, rows_per_tile, 128) planar point coordinates (VMEM)
    # u/v_ref:    (1, rows_per_tile, 128) planar image coordinates (VMEM)
    b = pl.program_id(0)

    r00 = params_ref[b, 0]
    r01 = params_ref[b, 1]
    r02 = params_ref[b, 2]
    r10 = params_ref[b, 3]
    r11 = params_ref[b, 4]
    r12 = params_ref[b, 5]
    r20 = params_ref[b, 6]
    r21 = params_ref[b, 7]
    r22 = params_ref[b, 8]
    tx = params_ref[b, 9]
    ty = params_ref[b, 10]
    tz = params_ref[b, 11]
    fx = params_ref[b, 12]
    fy = params_ref[b, 13]
    cx = params_ref[b, 14]
    cy = params_ref[b, 15]

    x = x_ref[...]
    y = y_ref[...]
    z = z_ref[...]

    # cam = R @ p + t as scalar-broadcast VPU FMAs (no MXU involvement).
    cam_x = r00 * x + r01 * y + r02 * z + tx
    cam_y = r10 * x + r11 * y + r12 * z + ty
    cam_z = r20 * x + r21 * y + r22 * z + tz

    # Perspective divide: EUP approximate reciprocal + one Newton refinement
    # (restores ~full f32 accuracy; shared by both output rows).
    inv_z = pl.reciprocal(cam_z, approx=True)
    inv_z = inv_z * (2.0 - cam_z * inv_z)

    u_ref[...] = (fx * cam_x * inv_z + cx).astype(u_ref.dtype)
    v_ref[...] = (fy * cam_y * inv_z + cy).astype(v_ref.dtype)


def perspective_camera_forward(points, rotation, translation,
                               focal_length_x, focal_length_y, center,
                               *, min_points_for_pallas=1024,
                               max_rows_per_tile=MAX_ROWS_PER_TILE):
    """points: [B, N, 3] f32 -> img_points: [B, N, 2] f32 (PyTorch convention)."""
    B, N, _ = points.shape
    dtype = points.dtype

    # At tiny sizes the pallas_call is pure fixed overhead; use fused XLA.
    if N < min_points_for_pallas:
        return perspective_camera_ref(points, rotation, translation,
                                      focal_length_x, focal_length_y, center)

    # Pack all per-batch camera parameters into one SMEM-resident (B, 16) array.
    params = jnp.concatenate(
        [rotation.reshape(B, 9).astype(jnp.float32),
         translation.astype(jnp.float32),
         focal_length_x[:, None].astype(jnp.float32),
         focal_length_y[:, None].astype(jnp.float32),
         center.astype(jnp.float32)],
        axis=1)                                                   # (B, 16)

    # Planar, lane/sublane-dense layout: [B, rows_pad, 128] per coordinate.
    rows = max(1, pl.cdiv(N, LANE))
    rows_per_tile = min(_round_up(rows, SUBLANE), max_rows_per_tile)
    rows_pad = _round_up(rows, rows_per_tile)
    n_pad = rows_pad * LANE
    num_tiles = rows_pad // rows_per_tile

    def planar(coord, pad_value):
        p = points[:, :, coord]                                   # [B, N]
        p = jnp.pad(p, ((0, 0), (0, n_pad - N)), constant_values=pad_value)
        return p.reshape(B, rows_pad, LANE)

    x = planar(0, 0.0)
    y = planar(1, 0.0)
    z = planar(2, 1.0)     # pad z with 1 so the padded reciprocal stays finite

    plane_spec = pl.BlockSpec((1, rows_per_tile, LANE), lambda b, t: (b, t, 0))
    plane_shape = jax.ShapeDtypeStruct((B, rows_pad, LANE), dtype)

    u, v = pl.pallas_call(
        perspective_camera_kernel,
        out_shape=(plane_shape, plane_shape),
        grid_spec=pltpu.PrefetchScalarGridSpec(
            num_scalar_prefetch=0,
            grid=(B, num_tiles),
            in_specs=[
                pl.BlockSpec(memory_space=pltpu.MemorySpace.SMEM),  # params
                plane_spec, plane_spec, plane_spec,                 # x, y, z
            ],
            out_specs=[plane_spec, plane_spec],                     # u, v
        ),
        compiler_params=pltpu.CompilerParams(
            dimension_semantics=("parallel", "parallel")),
    )(params, x, y, z)

    # Single layout conversion back to the PyTorch [B, N, 2] convention.
    u = u.reshape(B, n_pad)[:, :N]
    v = v.reshape(B, n_pad)[:, :N]
    return jnp.stack([u, v], axis=-1)


def perspective_camera_ref(points, rotation, translation, fx, fy, center):
    """Pure-JAX reference mirroring the PyTorch forward exactly."""
    B = points.shape[0]
    dtype = points.dtype
    # transform_mat: [R | t] with bottom row [0, 0, 0, 1]  -> [B, 4, 4]
    top = jnp.concatenate([rotation, translation[:, :, None]], axis=2)
    bottom = jnp.tile(jnp.array([[[0., 0., 0., 1.]]], dtype=dtype), (B, 1, 1))
    camera_transform = jnp.concatenate([top, bottom], axis=1)

    homog = jnp.ones(points.shape[:-1] + (1,), dtype=dtype)
    points_h = jnp.concatenate([points, homog], axis=-1)
    projected = jnp.einsum('bki,bji->bjk', camera_transform, points_h)
    img = projected[:, :, :2] / projected[:, :, 2:3]

    camera_mat = jnp.zeros((B, 2, 2), dtype=dtype)
    camera_mat = camera_mat.at[:, 0, 0].set(fx).at[:, 1, 1].set(fy)
    img = jnp.einsum('bki,bji->bjk', camera_mat, img) + center[:, None, :]
    return img


if __name__ == "__main__":
    key = jax.random.PRNGKey(0)
    B = 2
    FOCAL_LENGTH = 5000.0

    # Deterministic "parameters" matching the module's __init__ shapes.
    c, s = jnp.cos(0.1), jnp.sin(0.1)
    rot0 = jnp.array([[c, -s, 0.0], [s, c, 0.0], [0.0, 0.0, 1.0]],
                     dtype=jnp.float32)
    rot1 = jnp.eye(3, dtype=jnp.float32)
    rotation = jnp.stack([rot0, rot1], axis=0)                       # [B, 3, 3]
    translation = jnp.array([[0.1, 0.2, 0.3], [-0.1, 0.0, 0.2]],
                            dtype=jnp.float32)                       # [B, 3]
    focal_x = jnp.full((B,), FOCAL_LENGTH, dtype=jnp.float32)        # [B]
    focal_y = jnp.full((B,), FOCAL_LENGTH, dtype=jnp.float32)        # [B]
    center = jnp.array([[10.0, 20.0], [-5.0, 7.0]], dtype=jnp.float32)  # [B, 2]

    def run_check(N, **kwargs):
        k_pts = jax.random.fold_in(key, N)
        pts = jax.random.normal(k_pts, (B, N, 3), dtype=jnp.float32)
        pts = pts.at[:, :, 2].add(5.0)   # keep z away from 0
        out = perspective_camera_forward(pts, rotation, translation,
                                         focal_x, focal_y, center, **kwargs)
        out = jax.block_until_ready(out)
        ref = perspective_camera_ref(pts, rotation, translation,
                                     focal_x, focal_y, center)
        assert out.shape == (B, N, 2), out.shape
        assert jnp.allclose(out, ref, rtol=1e-4, atol=1e-3), (
            f"N={N}: max abs err = {jnp.max(jnp.abs(out - ref))}")

    # Small demo shape (force the Pallas path).
    run_check(8, min_points_for_pallas=0)
    # Multi-row-of-lanes + multi-tile grid path (grid = (B, 2)).
    run_check(2048, min_points_for_pallas=0, max_rows_per_tile=8)

    print("KERNEL_OK")
</pallas_src>

<mosaic_0001>
module attributes {stable_mosaic.version = 11 : i64} {
  func.func @perspective_camera_kernel(%arg0: i32, %arg1: i32, %arg2: memref<2x16xf32, #tpu.memory_space<smem>>, %arg3: memref<1x8x128xf32, #tpu.memory_space<vmem>>, %arg4: memref<1x8x128xf32, #tpu.memory_space<vmem>>, %arg5: memref<1x8x128xf32, #tpu.memory_space<vmem>>, %arg6: memref<1x8x128xf32, #tpu.memory_space<vmem>>, %arg7: memref<1x8x128xf32, #tpu.memory_space<vmem>>) attributes {dimension_semantics = [#tpu.dimension_semantics<parallel>, #tpu.dimension_semantics<parallel>], iteration_bounds = array<i64: 2, 1>, scalar_prefetch = 0 : i64, scratch_operands = 0 : i64, tpu.core_type = #tpu.core_type<tc>, window_params = [{transform_indices = @transform_0, window_bounds = array<i64: 2, 16>}, {transform_indices = @transform_1, window_bounds = array<i64: 1, 8, 128>}, {transform_indices = @transform_2, window_bounds = array<i64: 1, 8, 128>}, {transform_indices = @transform_3, window_bounds = array<i64: 1, 8, 128>}, {transform_indices = @transform_4, window_bounds = array<i64: 1, 8, 128>}, {transform_indices = @transform_5, window_bounds = array<i64: 1, 8, 128>}]} {
    %0 = arith.index_cast %arg0 : i32 to index
    %c0 = arith.constant 0 : index
    %1 = memref.load %arg2[%0, %c0] : memref<2x16xf32, #tpu.memory_space<smem>>
    %2 = arith.index_cast %arg0 : i32 to index
    %c1 = arith.constant 1 : index
    %3 = memref.load %arg2[%2, %c1] : memref<2x16xf32, #tpu.memory_space<smem>>
    %4 = arith.index_cast %arg0 : i32 to index
    %c2 = arith.constant 2 : index
    %5 = memref.load %arg2[%4, %c2] : memref<2x16xf32, #tpu.memory_space<smem>>
    %6 = arith.index_cast %arg0 : i32 to index
    %c3 = arith.constant 3 : index
    %7 = memref.load %arg2[%6, %c3] : memref<2x16xf32, #tpu.memory_space<smem>>
    %8 = arith.index_cast %arg0 : i32 to index
    %c4 = arith.constant 4 : index
    %9 = memref.load %arg2[%8, %c4] : memref<2x16xf32, #tpu.memory_space<smem>>
    %10 = arith.index_cast %arg0 : i32 to index
    %c5 = arith.constant 5 : index
    %11 = memref.load %arg2[%10, %c5] : memref<2x16xf32, #tpu.memory_space<smem>>
    %12 = arith.index_cast %arg0 : i32 to index
    %c6 = arith.constant 6 : index
    %13 = memref.load %arg2[%12, %c6] : memref<2x16xf32, #tpu.memory_space<smem>>
    %14 = arith.index_cast %arg0 : i32 to index
    %c7 = arith.constant 7 : index
    %15 = memref.load %arg2[%14, %c7] : memref<2x16xf32, #tpu.memory_space<smem>>
    %16 = arith.index_cast %arg0 : i32 to index
    %c8 = arith.constant 8 : index
    %17 = memref.load %arg2[%16, %c8] : memref<2x16xf32, #tpu.memory_space<smem>>
    %18 = arith.index_cast %arg0 : i32 to index
    %c9 = arith.constant 9 : index
    %19 = memref.load %arg2[%18, %c9] : memref<2x16xf32, #tpu.memory_space<smem>>
    %20 = arith.index_cast %arg0 : i32 to index
    %c10 = arith.constant 10 : index
    %21 = memref.load %arg2[%20, %c10] : memref<2x16xf32, #tpu.memory_space<smem>>
    %22 = arith.index_cast %arg0 : i32 to index
    %c11 = arith.constant 11 : index
    %23 = memref.load %arg2[%22, %c11] : memref<2x16xf32, #tpu.memory_space<smem>>
    %24 = arith.index_cast %arg0 : i32 to index
    %c12 = arith.constant 12 : index
    %25 = memref.load %arg2[%24, %c12] : memref<2x16xf32, #tpu.memory_space<smem>>
    %26 = arith.index_cast %arg0 : i32 to index
    %c13 = arith.constant 13 : index
    %27 = memref.load %arg2[%26, %c13] : memref<2x16xf32, #tpu.memory_space<smem>>
    %28 = arith.index_cast %arg0 : i32 to index
    %c14 = arith.constant 14 : index
    %29 = memref.load %arg2[%28, %c14] : memref<2x16xf32, #tpu.memory_space<smem>>
    %30 = arith.index_cast %arg0 : i32 to index
    %c15 = arith.constant 15 : index
    %31 = memref.load %arg2[%30, %c15] : memref<2x16xf32, #tpu.memory_space<smem>>
    %c0_0 = arith.constant 0 : index
    %c0_1 = arith.constant 0 : index
    %c0_2 = arith.constant 0 : index
    %32 = vector.load %arg3[%c0_0, %c0_1, %c0_2] : memref<1x8x128xf32, #tpu.memory_space<vmem>>, vector<1x8x128xf32>
    %c0_3 = arith.constant 0 : index
    %c0_4 = arith.constant 0 : index
    %c0_5 = arith.constant 0 : index
    %33 = vector.load %arg4[%c0_3, %c0_4, %c0_5] : memref<1x8x128xf32, #tpu.memory_space<vmem>>, vector<1x8x128xf32>
    %c0_6 = arith.constant 0 : index
    %c0_7 = arith.constant 0 : index
    %c0_8 = arith.constant 0 : index
    %34 = vector.load %arg5[%c0_6, %c0_7, %c0_8] : memref<1x8x128xf32, #tpu.memory_space<vmem>>, vector<1x8x128xf32>
    %35 = vector.broadcast %1 : f32 to vector<1x8x128xf32>
    %36 = arith.mulf %35, %32 : vector<1x8x128xf32>
    %37 = vector.broadcast %3 : f32 to vector<1x8x128xf32>
    %38 = arith.mulf %37, %33 : vector<1x8x128xf32>
    %39 = arith.addf %36, %38 : vector<1x8x128xf32>
    %40 = vector.broadcast %5 : f32 to vector<1x8x128xf32>
    %41 = arith.mulf %40, %34 : vector<1x8x128xf32>
    %42 = arith.addf %39, %41 : vector<1x8x128xf32>
    %43 = vector.broadcast %19 : f32 to vector<1x8x128xf32>
    %44 = arith.addf %42, %43 : vector<1x8x128xf32>
    %45 = vector.broadcast %7 : f32 to vector<1x8x128xf32>
    %46 = arith.mulf %45, %32 : vector<1x8x128xf32>
    %47 = vector.broadcast %9 : f32 to vector<1x8x128xf32>
    %48 = arith.mulf %47, %33 : vector<1x8x128xf32>
    %49 = arith.addf %46, %48 : vector<1x8x128xf32>
    %50 = vector.broadcast %11 : f32 to vector<1x8x128xf32>
    %51 = arith.mulf %50, %34 : vector<1x8x128xf32>
    %52 = arith.addf %49, %51 : vector<1x8x128xf32>
    %53 = vector.broadcast %21 : f32 to vector<1x8x128xf32>
    %54 = arith.addf %52, %53 : vector<1x8x128xf32>
    %55 = vector.broadcast %13 : f32 to vector<1x8x128xf32>
    %56 = arith.mulf %55, %32 : vector<1x8x128xf32>
    %57 = vector.broadcast %15 : f32 to vector<1x8x128xf32>
    %58 = arith.mulf %57, %33 : vector<1x8x128xf32>
    %59 = arith.addf %56, %58 : vector<1x8x128xf32>
    %60 = vector.broadcast %17 : f32 to vector<1x8x128xf32>
    %61 = arith.mulf %60, %34 : vector<1x8x128xf32>
    %62 = arith.addf %59, %61 : vector<1x8x128xf32>
    %63 = vector.broadcast %23 : f32 to vector<1x8x128xf32>
    %64 = arith.addf %62, %63 : vector<1x8x128xf32>
    %65 = tpu.reciprocal %64 {approx = true} : vector<1x8x128xf32> -> vector<1x8x128xf32>
    %66 = arith.mulf %64, %65 : vector<1x8x128xf32>
    %cst = arith.constant 2.000000e+00 : f32
    %67 = vector.broadcast %cst : f32 to vector<1x8x128xf32>
    %68 = arith.subf %67, %66 : vector<1x8x128xf32>
    %69 = arith.mulf %65, %68 : vector<1x8x128xf32>
    %70 = vector.broadcast %25 : f32 to vector<1x8x128xf32>
    %71 = arith.mulf %70, %44 : vector<1x8x128xf32>
    %72 = arith.mulf %71, %69 : vector<1x8x128xf32>
    %73 = vector.broadcast %29 : f32 to vector<1x8x128xf32>
    %74 = arith.addf %72, %73 : vector<1x8x128xf32>
    %c0_9 = arith.constant 0 : index
    %c0_10 = arith.constant 0 : index
    %c0_11 = arith.constant 0 : index
    %75 = vector.load %arg6[%c0_9, %c0_10, %c0_11] : memref<1x8x128xf32, #tpu.memory_space<vmem>>, vector<1x8x128xf32>
    tpu.vector_store %arg6[%c0_9, %c0_10, %c0_11], %74 {strides = array<i32>} : memref<1x8x128xf32, #tpu.memory_space<vmem>>, vector<1x8x128xf32>,
    %76 = vector.broadcast %27 : f32 to vector<1x8x128xf32>
    %77 = arith.mulf %76, %54 : vector<1x8x128xf32>
    %78 = arith.mulf %77, %69 : vector<1x8x128xf32>
    %79 = vector.broadcast %31 : f32 to vector<1x8x128xf32>
    %80 = arith.addf %78, %79 : vector<1x8x128xf32>
    %c0_12 = arith.constant 0 : index
    %c0_13 = arith.constant 0 : index
    %c0_14 = arith.constant 0 : index
    %81 = vector.load %arg7[%c0_12, %c0_13, %c0_14] : memref<1x8x128xf32, #tpu.memory_space<vmem>>, vector<1x8x128xf32>
    tpu.vector_store %arg7[%c0_12, %c0_13, %c0_14], %80 {strides = array<i32>} : memref<1x8x128xf32, #tpu.memory_space<vmem>>, vector<1x8x128xf32>,
    return
  }
  func.func @transform_0(%arg0: i32, %arg1: i32) -> (i32, i32) {
    %c0_i32 = arith.constant 0 : i32
    %c0_i32_0 = arith.constant 0 : i32
    %c0_i32_1 = arith.constant 0 : i32
    return %c0_i32, %c0_i32_0 : i32, i32
  }
  func.func @transform_1(%arg0: i32, %arg1: i32) -> (i32, i32, i32) {
    %c0_i32 = arith.constant 0 : i32
    %c0_i32_0 = arith.constant 0 : i32
    return %arg0, %arg1, %c0_i32 : i32, i32, i32
  }
  func.func @transform_2(%arg0: i32, %arg1: i32) -> (i32, i32, i32) {
    %c0_i32 = arith.constant 0 : i32
    %c0_i32_0 = arith.constant 0 : i32
    return %arg0, %arg1, %c0_i32 : i32, i32, i32
  }
  func.func @transform_3(%arg0: i32, %arg1: i32) -> (i32, i32, i32) {
    %c0_i32 = arith.constant 0 : i32
    %c0_i32_0 = arith.constant 0 : i32
    return %arg0, %arg1, %c0_i32 : i32, i32, i32
  }
  func.func @transform_4(%arg0: i32, %arg1: i32) -> (i32, i32, i32) {
    %c0_i32 = arith.constant 0 : i32
    %c0_i32_0 = arith.constant 0 : i32
    return %arg0, %arg1, %c0_i32 : i32, i32, i32
  }
  func.func @transform_5(%arg0: i32, %arg1: i32) -> (i32, i32, i32) {
    %c0_i32 = arith.constant 0 : i32
    %c0_i32_0 = arith.constant 0 : i32
    return %arg0, %arg1, %c0_i32 : i32, i32, i32
  }
}

</mosaic_0001>

<llo_original>
// kernel: tpu_custom_call.1
$region0: #{tpu_custom_call.1}
  #allocation0 [shape = 'u32[]', space=smem, size = 0x4, offset = 0x4, fixed_abs, tag = 'smem constant byte address 0x4 - core index']
  #allocation1 [shape = 'u32[72,128]{1,0:T(1,128)}', space=vmem, size = 0x9000, scoped, tag = 'internal scratch']
  %s0 = inlined_call_operand.hbm [shape: f32[2,16], index: 0, kind: input, shape index: {}]
  %s1 = inlined_call_operand.hbm [shape: f32[2,8,128], index: 1, kind: input, shape index: {}]
  %s2 = inlined_call_operand.hbm [shape: f32[2,8,128], index: 2, kind: input, shape index: {}]
  %s3 = inlined_call_operand.hbm [shape: f32[2,8,128], index: 3, kind: input, shape index: {}]
  %s4 = inlined_call_operand.hbm [shape: f32[2,8,128], index: 4, kind: output, shape index: {0}]
  %s5 = inlined_call_operand.hbm [shape: f32[2,8,128], index: 5, kind: output, shape index: {1}]
  %6 = xla_tuple %s4, %s5
  %s7 = sld [smem:[#allocation0]]
  $region73: #{tpu_custom_call.1} parent=0
    _
  %s9 = ssub.s32 1, %s7
  %s10 = scalar_select 0, %s9, %s7
  $region1: #{tpu_custom_call.1} parent=0
    #allocation2 [shape = 'u8[1024]{0}', space=smem, size = 0x400, scoped, tag = 'input window, operand 0, single buffered']
    #allocation3 [shape = 's32[2]{0}', space=sflag, size = 0x8, scoped, tag = 'scoped memory for tpu_custom_call.1']
    #allocation4 [shape = 's32[2]{0}', space=sflag, size = 0x8, scoped, tag = 'scoped memory for tpu_custom_call.1']
    #allocation5 [shape = 's32[2]{0}', space=sflag, size = 0x8, scoped, tag = 'scoped memory for tpu_custom_call.1']
    #allocation6 [shape = 'u8[8192]{0}', space=vmem, size = 0x2000, scoped, tag = 'input window, operand 1']
    #allocation7 [shape = 'u8[8192]{0}', space=vmem, size = 0x2000, scoped, tag = 'input window, operand 2']
    #allocation8 [shape = 's32[2]{0}', space=sflag, size = 0x8, scoped, tag = 'scoped memory for tpu_custom_call.1']
    #allocation9 [shape = 'u8[8192]{0}', space=vmem, size = 0x2000, scoped, tag = 'input window, operand 3']
    #allocation10 [shape = 'u8[8192]{0}', space=vmem, size = 0x2000, scoped, tag = 'output window, operand 0']
    #allocation11 [shape = 'u8[8192]{0}', space=vmem, size = 0x2000, scoped, tag = 'output window, operand 1']
    #allocation12 [shape = 's32[2]{0}', space=sflag, size = 0x8, scoped, tag = 'scoped memory for tpu_custom_call.1']
    %11 = vsyncpa [#allocation5], 0
    %12 = vsyncpa [#allocation3], 0
    %s13 = scalar_lea.sflag [#allocation3], 1
    %14 = vsyncpa %s13, 0
    %15 = vsyncpa [#allocation8], 0
    %s16 = scalar_lea.sflag [#allocation8], 1
    %17 = vsyncpa %s16, 0
    %18 = vsyncpa [#allocation4], 0
    %s19 = scalar_lea.sflag [#allocation4], 1
    %20 = vsyncpa %s19, 0
    %21 = vsyncpa [#allocation12], 0
    %s22 = scalar_lea.sflag [#allocation12], 1
    %23 = vsyncpa %s22, 0
    loop: start=0, step=1, limit=4
    $region2: #{tpu_custom_call.1} parent=1 // loop_pre_header
      _
    $region3: #{tpu_custom_call.1} parent=1 // loop_header
      %s25 = sphi 0, %s29
      %p26 = scmp.ge.s32.totalorder %s25, 4
      %s32 = sphi 0, %s44
      %s33 = sphi 0, %s40
      %s34 = sphi 0, %s32
      %s35 = sphi 0, %s33
      %s36 = sphi 0, %s34
      %s37 = sphi 0, %s35
      %s45 = sphi 0, %s45
      %s47 = sphi 0, %s45
      %s48 = sphi 0, %s47
      %s62 = sphi 0, %s48
      %s70 = sphi 0, %s72
      %s73 = sphi 0, %s70
      %s74 = sphi 0, %s73
      %s90 = sphi 0, %s74
      %s98 = sphi 0, %s100
      %s101 = sphi 0, %s98
      %s102 = sphi 0, %s101
      %s118 = sphi 0, %s102
      %s126 = sphi 0, %s128
      %s129 = sphi 0, %s126
      %s130 = sphi 0, %s129
      %s146 = sphi 0, %s130
      %s154 = sphi 0, %s156
      %s157 = sphi 0, %s154
      %s158 = sphi 0, %s157
      %s174 = sphi 0, %s158
      %s182 = sphi 0, %s184
      %s185 = sphi 0, %s182
      %s186 = sphi 0, %s185
      %s202 = sphi 0, %s186
    $region4: #{tpu_custom_call.1} parent=1 // loop_header_branch
      %28 = sbr.rel (%p26) target = $region8
    $region5: #{tpu_custom_call.1} parent=1 // loop_body
      %s30 = ssub.s32 %s25, 1
      %s31 = ssub.s32 %s25, 2
      %s38 = sadd.s32 1, %s33
      %p39 = scmp.ge.s32.totalorder %s38, 1
      %s40 = scalar_select %p39, 0, %s38
      %s41 = sadd.s32 1, %s32
      %s42 = scalar_select %p39, %s41, %s32
      %p43 = scmp.ge.s32.totalorder %s42, 2
      %s44 = scalar_select %p43, 0, %s42
      %s46 = sadd.s32 %s45, 1
      %p49 = scmp.eq.s32.totalorder %s25, 1
      %p50 = scmp.ne.s32.totalorder %s45, %s47
      %p51 = scmp.eq.s32.totalorder %s25, 0
      %p52 = por %p50, %p51
      %p53 = scmp.ne.s32.totalorder %s45, %s47
      %p54 = scmp.eq.s32.totalorder %s30, 1
      %p55 = por %p53, %p54
      %p56 = scmp.ne.s32.totalorder %s47, %s48
      %p57 = scmp.eq.s32.totalorder %s30, 0
      %p58 = por %p56, %p57
      %p59 = scmp.ne.s32.totalorder %s47, %s48
      %p60 = scmp.eq.s32.totalorder %s31, 1
      %p61 = por %p59, %p60
      %p63 = scmp.ne.s32.totalorder %s48, %s62
      %p64 = scmp.eq.s32.totalorder %s31, 0
      %p65 = por %p63, %p64
      %s66 = ssub.s32 %s32, %s44
      %s67 = ssub.s32 %s33, %s40
      %s68 = sor.u32 %s66, %s67
      %p69 = scmp.eq.s32.totalorder %s68, 0
      %s71 = sadd.s32 %s70, 1
      %s72 = scalar_select %p69, %s70, %s71
      %p75 = pneg %p69
      %p76 = scmp.eq.s32.totalorder %s25, 1
      %p77 = por %p75, %p76
      %p78 = scmp.ne.s32.totalorder %s70, %s73
      %p79 = scmp.eq.s32.totalorder %s25, 0
      %p80 = por %p78, %p79
      %p81 = scmp.ne.s32.totalorder %s70, %s73
      %p82 = scmp.eq.s32.totalorder %s30, 1
      %p83 = por %p81, %p82
      %p84 = scmp.ne.s32.totalorder %s73, %s74
      %p85 = scmp.eq.s32.totalorder %s30, 0
      %p86 = por %p84, %p85
      %p87 = scmp.ne.s32.totalorder %s73, %s74
      %p88 = scmp.eq.s32.totalorder %s31, 1
      %p89 = por %p87, %p88
      %p91 = scmp.ne.s32.totalorder %s74, %s90
      %p92 = scmp.eq.s32.totalorder %s31, 0
      %p93 = por %p91, %p92
      %s94 = ssub.s32 %s32, %s44
      %s95 = ssub.s32 %s33, %s40
      %s96 = sor.u32 %s94, %s95
      %p97 = scmp.eq.s32.totalorder %s96, 0
      %s99 = sadd.s32 %s98, 1
      %s100 = scalar_select %p97, %s98, %s99
      %p103 = pneg %p97
      %p104 = scmp.eq.s32.totalorder %s25, 1
      %p105 = por %p103, %p104
      %p106 = scmp.ne.s32.totalorder %s98, %s101
      %p107 = scmp.eq.s32.totalorder %s25, 0
      %p108 = por %p106, %p107
      %p109 = scmp.ne.s32.totalorder %s98, %s101
      %p110 = scmp.eq.s32.totalorder %s30, 1
      %p111 = por %p109, %p110
      %p112 = scmp.ne.s32.totalorder %s101, %s102
      %p113 = scmp.eq.s32.totalorder %s30, 0
      %p114 = por %p112, %p113
      %p115 = scmp.ne.s32.totalorder %s101, %s102
      %p116 = scmp.eq.s32.totalorder %s31, 1
      %p117 = por %p115, %p116
      %p119 = scmp.ne.s32.totalorder %s102, %s118
      %p120 = scmp.eq.s32.totalorder %s31, 0
      %p121 = por %p119, %p120
      %s122 = ssub.s32 %s32, %s44
      %s123 = ssub.s32 %s33, %s40
      %s124 = sor.u32 %s122, %s123
      %p125 = scmp.eq.s32.totalorder %s124, 0
      %s127 = sadd.s32 %s126, 1
      %s128 = scalar_select %p125, %s126, %s127
      %p131 = pneg %p125
      %p132 = scmp.eq.s32.totalorder %s25, 1
      %p133 = por %p131, %p132
      %p134 = scmp.ne.s32.totalorder %s126, %s129
      %p135 = scmp.eq.s32.totalorder %s25, 0
      %p136 = por %p134, %p135
      %p137 = scmp.ne.s32.totalorder %s126, %s129
      %p138 = scmp.eq.s32.totalorder %s30, 1
      %p139 = por %p137, %p138
      %p140 = scmp.ne.s32.totalorder %s129, %s130
      %p141 = scmp.eq.s32.totalorder %s30, 0
      %p142 = por %p140, %p141
      %p143 = scmp.ne.s32.totalorder %s129, %s130
      %p144 = scmp.eq.s32.totalorder %s31, 1
      %p145 = por %p143, %p144
      %p147 = scmp.ne.s32.totalorder %s130, %s146
      %p148 = scmp.eq.s32.totalorder %s31, 0
      %p149 = por %p147, %p148
      %s150 = ssub.s32 %s32, %s44
      %s151 = ssub.s32 %s33, %s40
      %s152 = sor.u32 %s150, %s151
      %p153 = scmp.eq.s32.totalorder %s152, 0
      %s155 = sadd.s32 %s154, 1
      %s156 = scalar_select %p153, %s154, %s155
      %p159 = pneg %p153
      %p160 = scmp.eq.s32.totalorder %s25, 1
      %p161 = por %p159, %p160
      %p162 = scmp.ne.s32.totalorder %s154, %s157
      %p163 = scmp.eq.s32.totalorder %s25, 0
      %p164 = por %p162, %p163
      %p165 = scmp.ne.s32.totalorder %s154, %s157
      %p166 = scmp.eq.s32.totalorder %s30, 1
      %p167 = por %p165, %p166
      %p168 = scmp.ne.s32.totalorder %s157, %s158
      %p169 = scmp.eq.s32.totalorder %s30, 0
      %p170 = por %p168, %p169
      %p171 = scmp.ne.s32.totalorder %s157, %s158
      %p172 = scmp.eq.s32.totalorder %s31, 1
      %p173 = por %p171, %p172
      %p175 = scmp.ne.s32.totalorder %s158, %s174
      %p176 = scmp.eq.s32.totalorder %s31, 0
      %p177 = por %p175, %p176
      %s178 = ssub.s32 %s32, %s44
      %s179 = ssub.s32 %s33, %s40
      %s180 = sor.u32 %s178, %s179
      %p181 = scmp.eq.s32.totalorder %s180, 0
      %s183 = sadd.s32 %s182, 1
      %s184 = scalar_select %p181, %s182, %s183
      %p187 = pneg %p181
      %p188 = scmp.eq.s32.totalorder %s25, 1
      %p189 = por %p187, %p188
      %p190 = scmp.ne.s32.totalorder %s182, %s185
      %p191 = scmp.eq.s32.totalorder %s25, 0
      %p192 = por %p190, %p191
      %p193 = scmp.ne.s32.totalorder %s182, %s185
      %p194 = scmp.eq.s32.totalorder %s30, 1
      %p195 = por %p193, %p194
      %p196 = scmp.ne.s32.totalorder %s185, %s186
      %p197 = scmp.eq.s32.totalorder %s30, 0
      %p198 = por %p196, %p197
      %p199 = scmp.ne.s32.totalorder %s185, %s186
      %p200 = scmp.eq.s32.totalorder %s31, 1
      %p201 = por %p199, %p200
      %p203 = scmp.ne.s32.totalorder %s186, %s202
      %p204 = scmp.eq.s32.totalorder %s31, 0
      %p205 = por %p203, %p204
      %p206 = scmp.le.s32.totalorder 1, %s25
      %p207 = scmp.lt.s32.totalorder %s25, 3
      %p208 = pnand %p206, %p207
      %p209 = pneg %p208
      // Predicated region
      $region9: #{tpu_custom_call.1} parent=5 // pred_check
        _
      $region10: #{tpu_custom_call.1} parent=5 // pred_check_branch
        %211 = sbr.rel (%p208) target = $region12
      $region11: #{tpu_custom_call.1} parent=5 // pred_region
        %s212 = ssub.s32 %s25, 1
        // Predicated region
        $region13: #{tpu_custom_call.1} parent=11 // pred_check
          %p213 = pneg %p58
        $region14: #{tpu_custom_call.1} parent=11 // pred_check_branch
          %215 = sbr.rel (%p213) target = $region16
        $region15: #{tpu_custom_call.1} parent=11 // pred_region
          %217 = vsyncadd [#allocation5], 0
          %s219 = sshll.u32 %s0, 4
          %s220 = int_to_ptr.hbm [resolvable:$true] %s219
          %222 = dma.hbm_to_smem %s220, 32, [#allocation2], [#allocation5]
        $region16: #{tpu_custom_call.1} parent=11 // pred_fallthru
          _
      $region12: #{tpu_custom_call.1} parent=5 // pred_fallthru
        _
      %p223 = scmp.lt.s32.totalorder %s25, 2
      // Predicated region
      $region17: #{tpu_custom_call.1} parent=5 // pred_check
        %p224 = pneg %p223
      $region18: #{tpu_custom_call.1} parent=5 // pred_check_branch
        %226 = sbr.rel (%p224) target = $region20
      $region19: #{tpu_custom_call.1} parent=5 // pred_region
        // Predicated region
        $region21: #{tpu_custom_call.1} parent=19 // pred_check
          %p227 = pneg %p80
        $region22: #{tpu_custom_call.1} parent=19 // pred_check_branch
          %229 = sbr.rel (%p227) target = $region24
        $region23: #{tpu_custom_call.1} parent=19 // pred_region
          %s230 = sand.u32 %s70, 1
          %s231 = scalar_lea.sflag [#allocation3], %s230
          %s232 = sand.u32 %s70, 1
          %s233 = smul.addr %s232, 8
          %s234 = scalar_lea.vmem [#allocation6], %s233
          %236 = vsyncadd %s231, 0
          %s237 = sadd.s32 %s33, %s32
          %s238 = smul.addr %s237, 8
          %s239 = scalar_lea.hbm %s1, %s238
          %s241 = sshll.u32 %s239, 4
          %s242 = int_to_ptr.hbm [resolvable:$true] %s241
          %s243 = sshll.u32 %s234, 4
          %s244 = int_to_ptr.vmem [resolvable:$true] %s243
          %246 = dma.hbm_to_vmem [thread:$0]  %s242, 128, %s244, %s231
        $region24: #{tpu_custom_call.1} parent=19 // pred_fallthru
          _
        // Predicated region
        $region25: #{tpu_custom_call.1} parent=19 // pred_check
          %p247 = pneg %p108
        $region26: #{tpu_custom_call.1} parent=19 // pred_check_branch
          %249 = sbr.rel (%p247) target = $region28
        $region27: #{tpu_custom_call.1} parent=19 // pred_region
          %s250 = sand.u32 %s25, 1
          %s251 = scalar_lea.sflag [#allocation8], %s250
          %s252 = sand.u32 %s98, 1
          %s253 = smul.addr %s252, 8
          %s254 = scalar_lea.vmem [#allocation7], %s253
          %256 = vsyncadd %s251, 0
          %s257 = sadd.s32 %s33, %s32
          %s258 = smul.addr %s257, 8
          %s259 = scalar_lea.hbm %s2, %s258
          %s261 = sshll.u32 %s259, 4
          %s262 = int_to_ptr.hbm [resolvable:$true] %s261
          %s263 = sshll.u32 %s254, 4
          %s264 = int_to_ptr.vmem [resolvable:$true] %s263
          %266 = dma.hbm_to_vmem [thread:$0]  %s262, 128, %s264, %s251
        $region28: #{tpu_custom_call.1} parent=19 // pred_fallthru
          _
        // Predicated region
        $region29: #{tpu_custom_call.1} parent=19 // pred_check
          %p267 = pneg %p136
        $region30: #{tpu_custom_call.1} parent=19 // pred_check_branch
          %269 = sbr.rel (%p267) target = $region32
        $region31: #{tpu_custom_call.1} parent=19 // pred_region
          %s270 = sand.u32 %s25, 1
          %s271 = scalar_lea.sflag [#allocation8], %s270
          %s272 = sand.u32 %s126, 1
          %s273 = smul.addr %s272, 8
          %s274 = scalar_lea.vmem [#allocation9], %s273
          %276 = vsyncadd %s271, 0
          %s277 = sadd.s32 %s33, %s32
          %s278 = smul.addr %s277, 8
          %s279 = scalar_lea.hbm %s3, %s278
          %s281 = sshll.u32 %s279, 4
          %s282 = int_to_ptr.hbm [resolvable:$true] %s281
          %s283 = sshll.u32 %s274, 4
          %s284 = int_to_ptr.vmem [resolvable:$true] %s283
          %286 = dma.hbm_to_vmem [thread:$0]  %s282, 128, %s284, %s271
        $region32: #{tpu_custom_call.1} parent=19 // pred_fallthru
          _
      $region20: #{tpu_custom_call.1} parent=5 // pred_fallthru
        _
      %p287 = scmp.le.s32.totalorder 1, %s25
      %p288 = scmp.lt.s32.totalorder %s25, 3
      %p289 = pnand %p287, %p288
      %p290 = pneg %p289
      // Predicated region
      $region33: #{tpu_custom_call.1} parent=5 // pred_check
        _
      $region34: #{tpu_custom_call.1} parent=5 // pred_check_branch
        %292 = sbr.rel (%p289) target = $region36
      $region35: #{tpu_custom_call.1} parent=5 // pred_region
        %s293 = ssub.s32 %s25, 1
        // Predicated region
        $region37: #{tpu_custom_call.1} parent=35 // pred_check
          %p294 = pneg %p58
        $region38: #{tpu_custom_call.1} parent=35 // pred_check_branch
          %296 = sbr.rel (%p294) target = $region40
        $region39: #{tpu_custom_call.1} parent=35 // pred_region
          %298 = dma.done [#allocation5], 32
        $region40: #{tpu_custom_call.1} parent=35 // pred_fallthru
          _
        %s299 = sand.u32 %s73, 1
        %s300 = scalar_lea.sflag [#allocation3], %s299
        %s301 = sand.u32 %s73, 1
        %s302 = smul.addr %s301, 8
        %s303 = scalar_lea.vmem [#allocation6], %s302
        // Predicated region
        $region41: #{tpu_custom_call.1} parent=35 // pred_check
          %p304 = pneg %p86
        $region42: #{tpu_custom_call.1} parent=35 // pred_check_branch
          %306 = sbr.rel (%p304) target = $region44
        $region43: #{tpu_custom_call.1} parent=35 // pred_region
          %308 = dma.done %s300, 128
        $region44: #{tpu_custom_call.1} parent=35 // pred_fallthru
          _
        %s309 = sand.u32 %s30, 1
        %s310 = scalar_lea.sflag [#allocation8], %s309
        %s311 = sand.u32 %s101, 1
        %s312 = smul.addr %s311, 8
        %s313 = scalar_lea.vmem [#allocation7], %s312
        // Predicated region
        $region45: #{tpu_custom_call.1} parent=35 // pred_check
          %p314 = pneg %p114
        $region46: #{tpu_custom_call.1} parent=35 // pred_check_branch
          %316 = sbr.rel (%p314) target = $region48
        $region47: #{tpu_custom_call.1} parent=35 // pred_region
          %318 = dma.done %s310, 128
        $region48: #{tpu_custom_call.1} parent=35 // pred_fallthru
          _
        %s319 = sand.u32 %s30, 1
        %s320 = scalar_lea.sflag [#allocation8], %s319
        %s321 = sand.u32 %s129, 1
        %s322 = smul.addr %s321, 8
        %s323 = scalar_lea.vmem [#allocation9], %s322
        // Predicated region
        $region49: #{tpu_custom_call.1} parent=35 // pred_check
          %p324 = pneg %p142
        $region50: #{tpu_custom_call.1} parent=35 // pred_check_branch
          %326 = sbr.rel (%p324) target = $region52
        $region51: #{tpu_custom_call.1} parent=35 // pred_region
          %328 = dma.done %s320, 128
        $region52: #{tpu_custom_call.1} parent=35 // pred_fallthru
          _
        %329 = sfence
        %p330 = pneg %p58
        %p331 = pneg %p55
        %s332 = sand.u32 %s73, 1
        %s333 = scalar_lea.sflag [#allocation3], %s332
        %s334 = sand.u32 %s73, 1
        %s335 = smul.addr %s334, 8
        %s336 = scalar_lea.vmem [#allocation6], %s335
        %p337 = pneg %p86
        %p338 = pneg %p83
        %s339 = sand.u32 %s30, 1
        %s340 = scalar_lea.sflag [#allocation8], %s339
        %s341 = sand.u32 %s101, 1
        %s342 = smul.addr %s341, 8
        %s343 = scalar_lea.vmem [#allocation7], %s342
        %p344 = pneg %p114
        %p345 = pneg %p111
        %s346 = sand.u32 %s30, 1
        %s347 = scalar_lea.sflag [#allocation8], %s346
        %s348 = sand.u32 %s129, 1
        %s349 = smul.addr %s348, 8
        %s350 = scalar_lea.vmem [#allocation9], %s349
        %p351 = pneg %p142
        %p352 = pneg %p139
        %p353 = pneg %p170
        %p354 = pneg %p167
        %s355 = sand.u32 %s157, 1
        %s356 = scalar_lea.sflag [#allocation4], %s355
        %s357 = sand.u32 %s157, 1
        %s358 = smul.addr %s357, 8
        %s359 = scalar_lea.vmem [#allocation10], %s358
        %p360 = pneg %p198
        %p361 = pneg %p195
        %s362 = sand.u32 %s185, 1
        %s363 = scalar_lea.sflag [#allocation12], %s362
        %s364 = sand.u32 %s185, 1
        %s365 = smul.addr %s364, 8
        %s366 = scalar_lea.vmem [#allocation11], %s365
        %s367 = smul.u32 %s34, 128
        %s368 = sld [smem:[#allocation2 + %s367]]
        %s369 = sadd.s32 %s367, 1
        %s370 = sld [smem:[#allocation2 + %s369]]
        %s371 = sadd.s32 %s367, 2
        %s372 = sld [smem:[#allocation2 + %s371]]
        %s373 = sadd.s32 %s367, 3
        %s374 = sld [smem:[#allocation2 + %s373]]
        %s375 = sadd.s32 %s367, 4
        %s376 = sld [smem:[#allocation2 + %s375]]
        %s377 = sadd.s32 %s367, 5
        %s378 = sld [smem:[#allocation2 + %s377]]
        %s379 = sadd.s32 %s367, 6
        %s380 = sld [smem:[#allocation2 + %s379]]
        %s381 = sadd.s32 %s367, 7
        %s382 = sld [smem:[#allocation2 + %s381]]
        %s383 = sadd.s32 %s367, 8
        %s384 = sld [smem:[#allocation2 + %s383]]
        %s385 = sadd.s32 %s367, 9
        %s386 = sld [smem:[#allocation2 + %s385]]
        %s387 = sadd.s32 %s367, 10
        %s388 = sld [smem:[#allocation2 + %s387]]
        %s389 = sadd.s32 %s367, 11
        %s390 = sld [smem:[#allocation2 + %s389]]
        %s391 = sadd.s32 %s367, 12
        %s392 = sld [smem:[#allocation2 + %s391]]
        %s393 = sadd.s32 %s367, 13
        %s394 = sld [smem:[#allocation2 + %s393]]
        %s395 = sadd.s32 %s367, 14
        %s396 = sld [smem:[#allocation2 + %s395]]
        %s397 = sadd.s32 %s367, 15
        %s398 = sld [smem:[#allocation2 + %s397]]
        %v399 = vld [vmem:[%s303] sm:$0xff]
        %v400 = vld [vmem:[%s313] sm:$0xff]
        %v401 = vld [vmem:[%s323] sm:$0xff]
        %v402 = vstv %s368
        %v403 = vmul.f32 %v402, %v399
        %v404 = vstv %s370
        %v405 = vmul.f32 %v404, %v400
        %v406 = vadd.f32 %v403, %v405
        %v407 = vstv %s372
        %v408 = vmul.f32 %v407, %v401
        %v409 = vadd.f32 %v406, %v408
        %v410 = vstv %s386
        %v411 = vadd.f32 %v409, %v410
        %v412 = vstv %s374
        %v413 = vmul.f32 %v412, %v399
        %v414 = vstv %s376
        %v415 = vmul.f32 %v414, %v400
        %v416 = vadd.f32 %v413, %v415
        %v417 = vstv %s378
        %v418 = vmul.f32 %v417, %v401
        %v419 = vadd.f32 %v416, %v418
        %v420 = vstv %s388
        %v421 = vadd.f32 %v419, %v420
        %v422 = vstv %s380
        %v423 = vmul.f32 %v422, %v399
        %v424 = vstv %s382
        %v425 = vmul.f32 %v424, %v400
        %v426 = vadd.f32 %v423, %v425
        %v427 = vstv %s384
        %v428 = vmul.f32 %v427, %v401
        %v429 = vadd.f32 %v426, %v428
        %v430 = vstv %s390
        %v431 = vadd.f32 %v429, %v430
        %v432 = vrcp.pop %v431
        %v433 = vmul.f32 %v431, %v432
        %v434 = vsub.f32 2.0, %v433
        %v435 = vmul.f32 %v432, %v434
        %v436 = vstv %s392
        %v437 = vmul.f32 %v436, %v411
        %v438 = vmul.f32 %v437, %v435
        %v439 = vstv %s396
        %v440 = vadd.f32 %v438, %v439
        %441 = vst [vmem:[%s359] sm:$0xff] %v440
        %v442 = vstv %s394
        %v443 = vmul.f32 %v442, %v421
        %v444 = vmul.f32 %v443, %v435
        %v445 = vstv %s398
        %v446 = vadd.f32 %v444, %v445
        %447 = vst [vmem:[%s366] sm:$0xff] %v446
        %s448 = sand.u32 %s157, 1
        %s449 = scalar_lea.sflag [#allocation4], %s448
        %s450 = sand.u32 %s157, 1
        %s451 = smul.addr %s450, 8
        %s452 = scalar_lea.vmem [#allocation10], %s451
        %s453 = sand.u32 %s185, 1
        %s454 = scalar_lea.sflag [#allocation12], %s453
        %s455 = sand.u32 %s185, 1
        %s456 = smul.addr %s455, 8
        %s457 = scalar_lea.vmem [#allocation11], %s456
        // Predicated region
        $region53: #{tpu_custom_call.1} parent=35 // pred_check
          %p458 = pneg %p167
        $region54: #{tpu_custom_call.1} parent=35 // pred_check_branch
          %460 = sbr.rel (%p458) target = $region56
        $region55: #{tpu_custom_call.1} parent=35 // pred_region
          %462 = vsyncadd %s449, 0
          %s463 = sadd.s32 %s35, %s34
          %s464 = smul.addr %s463, 8
          %s465 = scalar_lea.hbm %s4, %s464
          %s467 = sshll.u32 %s452, 4
          %s468 = int_to_ptr.vmem [resolvable:$true] %s467
          %s469 = sshll.u32 %s465, 4
          %s470 = int_to_ptr.hbm [resolvable:$true] %s469
          %472 = dma.vmem_to_hbm [thread:$0]  %s468, 128, %s470, %s449
        $region56: #{tpu_custom_call.1} parent=35 // pred_fallthru
          _
        // Predicated region
        $region57: #{tpu_custom_call.1} parent=35 // pred_check
          %p473 = pneg %p195
        $region58: #{tpu_custom_call.1} parent=35 // pred_check_branch
          %475 = sbr.rel (%p473) target = $region60
        $region59: #{tpu_custom_call.1} parent=35 // pred_region
          %477 = vsyncadd %s454, 0
          %s478 = sadd.s32 %s35, %s34
          %s479 = smul.addr %s478, 8
          %s480 = scalar_lea.hbm %s5, %s479
          %s482 = sshll.u32 %s457, 4
          %s483 = int_to_ptr.vmem [resolvable:$true] %s482
          %s484 = sshll.u32 %s480, 4
          %s485 = int_to_ptr.hbm [resolvable:$true] %s484
          %487 = dma.vmem_to_hbm [thread:$0]  %s483, 128, %s485, %s454
        $region60: #{tpu_custom_call.1} parent=35 // pred_fallthru
          _
      $region36: #{tpu_custom_call.1} parent=5 // pred_fallthru
        _
      %p488 = scmp.le.s32.totalorder 2, %s25
      // Predicated region
      $region61: #{tpu_custom_call.1} parent=5 // pred_check
        %p489 = pneg %p488
      $region62: #{tpu_custom_call.1} parent=5 // pred_check_branch
        %491 = sbr.rel (%p489) target = $region64
      $region63: #{tpu_custom_call.1} parent=5 // pred_region
        %s492 = ssub.s32 %s25, 2
        // Predicated region
        $region65: #{tpu_custom_call.1} parent=63 // pred_check
          %p493 = pneg %p173
        $region66: #{tpu_custom_call.1} parent=63 // pred_check_branch
          %495 = sbr.rel (%p493) target = $region68
        $region67: #{tpu_custom_call.1} parent=63 // pred_region
          %s496 = sand.u32 %s158, 1
          %s497 = scalar_lea.sflag [#allocation4], %s496
          %s498 = sand.u32 %s158, 1
          %s499 = smul.addr %s498, 8
          %s500 = scalar_lea.vmem [#allocation10], %s499
          %502 = dma.done %s497, 128
        $region68: #{tpu_custom_call.1} parent=63 // pred_fallthru
          _
        // Predicated region
        $region69: #{tpu_custom_call.1} parent=63 // pred_check
          %p503 = pneg %p201
        $region70: #{tpu_custom_call.1} parent=63 // pred_check_branch
          %505 = sbr.rel (%p503) target = $region72
        $region71: #{tpu_custom_call.1} parent=63 // pred_region
          %s506 = sand.u32 %s186, 1
          %s507 = scalar_lea.sflag [#allocation12], %s506
          %s508 = sand.u32 %s186, 1
          %s509 = smul.addr %s508, 8
          %s510 = scalar_lea.vmem [#allocation11], %s509
          %512 = dma.done %s507, 128
        $region72: #{tpu_custom_call.1} parent=63 // pred_fallthru
          _
      $region64: #{tpu_custom_call.1} parent=5 // pred_fallthru
        _
    $region6: #{tpu_custom_call.1} parent=1 // loop_footer
      %s29 = sadd.s32 1, %s25
    $region7: #{tpu_custom_call.1} parent=1 // loop_footer_branch
      %24 = sbr.rel target = $region3
    $region8: #{tpu_custom_call.1} parent=1 // loop_exit
      _
    %513 = vsyncpa [#allocation3], 1
    %s514 = scalar_lea.sflag [#allocation3], 1
    %515 = vsyncpa %s514, 1
    %516 = vsyncpa [#allocation8], 1
    %s517 = scalar_lea.sflag [#allocation8], 1
    %518 = vsyncpa %s517, 1
    %519 = vsyncpa [#allocation4], 1
    %s520 = scalar_lea.sflag [#allocation4], 1
    %521 = vsyncpa %s520, 1
    %522 = vsyncpa [#allocation12], 1
    %s523 = scalar_lea.sflag [#allocation12], 1
    %524 = vsyncpa %s523, 1
    %525 = vsyncpa [#allocation5], 1
    %s526 = scalar_lea.sflag [#allocation5], 1
    %527 = vsyncpa %s526, 1

</llo_original>
